<compile_context>
chip_gen: v7x
topology: tpu7x:2x2x1
jax: 0.10.0
libtpu: 0.0.40
codegen_flags: <defaults>
</compile_context>

<pallas_src>
import functools

import jax
import jax.numpy as jnp
from jax import lax
from jax.experimental import pallas as pl
from jax.experimental.pallas import tpu as pltpu


_VMEM_LIMIT_BYTES = 48 * 1024 * 1024   # <= v7x's 64 MiB physical VMEM per TC.


def _log_sigmoid(x):
    # Overflow-safe log(sigmoid(x)) = min(x, 0) - log(1 + exp(-|x|)).
    # The exp argument is always <= 0, so this never overflows for large |x|
    # (matches torch.nn.functional.logsigmoid); same EUP cost as the naive form.
    return jnp.minimum(x, 0.0) - jnp.log(1.0 + jnp.exp(-jnp.abs(x)))


def _pos_kernel(w_ref, ui1_ref, uj1_ref, ui2_ref, ujp2_ref,
                first_ref, second_ref, *, n_valid):
    """Positive-edge tiles: first-order loss + second-order positive part."""
    t = pl.program_id(0)
    te = ui1_ref.shape[0]

    @pl.when(t == 0)
    def _():
        first_ref[...] = jnp.zeros_like(first_ref)
        second_ref[...] = jnp.zeros_like(second_ref)

    base = t * te
    # Ragged-tail masks built in-kernel (no mask streams from HBM). The final
    # partial block may read out-of-bounds garbage; every use of it is gated.
    valid_col = (base + lax.broadcasted_iota(jnp.int32, (te, 1), 0)) < n_valid
    valid_row = (base + lax.broadcasted_iota(jnp.int32, (1, te), 1)) < n_valid

    # Upcast after load so bf16-stored tables would stream at half the bytes.
    ui1 = ui1_ref[...].astype(jnp.float32)
    uj1 = uj1_ref[...].astype(jnp.float32)
    ui2 = ui2_ref[...].astype(jnp.float32)
    ujp2 = ujp2_ref[...].astype(jnp.float32)

    # Per-edge dots: reduce the small embedding axis; edges stay on sublanes.
    dot1 = jnp.sum(ui1 * uj1, axis=1, keepdims=True)      # (te, 1)
    dot2 = jnp.sum(ui2 * ujp2, axis=1, keepdims=True)     # (te, 1)
    # Zero garbage dots so log-sigmoid stays finite on padded rows.
    dot1 = jnp.where(valid_col, dot1, 0.0)
    dot2 = jnp.where(valid_col, dot2, 0.0)

    w = jnp.where(valid_row, w_ref[...].astype(jnp.float32), 0.0)   # (1, te)

    # First-order weighted reduction as a (1,te)@(te,1) mat-vec: keeps the
    # weight stream lane-dense in HBM (no narrow (P,1) DMA) and fuses the
    # masked multiply + sum. The per-edge dots above stay off the MXU.
    first_ref[...] += -jnp.dot(w, _log_sigmoid(dot1),
                               preferred_element_type=jnp.float32)
    # Second-order positive part (unweighted).
    second_ref[...] += -jnp.sum(
        jnp.where(valid_col, _log_sigmoid(dot2), 0.0), keepdims=True)


def _neg_kernel(uin_ref, ujpn_ref, second_ref, *, n_valid):
    """Negative-edge tiles: second-order negative part."""
    t = pl.program_id(0)
    te = uin_ref.shape[0]

    @pl.when(t == 0)
    def _():
        second_ref[...] = jnp.zeros_like(second_ref)

    base = t * te
    valid_col = (base + lax.broadcasted_iota(jnp.int32, (te, 1), 0)) < n_valid

    uin = uin_ref[...].astype(jnp.float32)
    ujpn = ujpn_ref[...].astype(jnp.float32)
    dotn = jnp.sum(uin * ujpn, axis=1, keepdims=True)      # (te, 1)
    dotn = jnp.where(valid_col, dotn, 0.0)
    second_ref[...] += -jnp.sum(
        jnp.where(valid_col, _log_sigmoid(-dotn), 0.0), keepdims=True)


def _edge_tile(n, tile_e):
    """Largest 128-multiple tile <= min(tile_e, n) (at least 128)."""
    return max(128, min(tile_e, (n // 128) * 128))


def line_losses_pallas(u_i1, u_j1, pos_edge_w, u_i2, u_jp2, u_in, u_jpn,
                       *, tile_e=4096):
    """Compute the two LINE losses from gathered per-edge embedding rows."""
    assert tile_e % 128 == 0 and tile_e >= 128, "tile_e must be a multiple of 128"
    P, D = u_i1.shape
    N = u_in.shape[0]

    w2d = pos_edge_w.reshape(1, P)   # lane-dense weight row (free reshape)

    # Tiny-stream fallback only: pad up to one 128-row tile (< 16 KiB copy).
    if P < 128:
        pad = 128 - P
        u_i1, u_j1, u_i2, u_jp2 = tuple(
            jnp.pad(a, ((0, pad), (0, 0))) for a in (u_i1, u_j1, u_i2, u_jp2))
        w2d = jnp.pad(w2d, ((0, 0), (0, pad)))
    if N < 128:
        pad = 128 - N
        u_in, u_jpn = tuple(jnp.pad(a, ((0, pad), (0, 0))) for a in (u_in, u_jpn))

    tp = _edge_tile(P, tile_e)
    tn = _edge_tile(N, tile_e)

    out_spec = pl.BlockSpec((1, 1), lambda t: (0, 0))
    params = pltpu.CompilerParams(
        dimension_semantics=("arbitrary",),   # scalar accumulators across tiles
        vmem_limit_bytes=_VMEM_LIMIT_BYTES)

    esz = u_i1.dtype.itemsize
    pos_cost = pl.CostEstimate(
        flops=int(4 * D * P + 16 * P),
        transcendentals=int(4 * P),
        bytes_accessed=int(4 * D * P * esz + P * pos_edge_w.dtype.itemsize + 8))
    first, second_pos = pl.pallas_call(
        functools.partial(_pos_kernel, n_valid=P),
        out_shape=(jax.ShapeDtypeStruct((1, 1), jnp.float32),
                   jax.ShapeDtypeStruct((1, 1), jnp.float32)),
        grid=(pl.cdiv(P, tp),),
        in_specs=[pl.BlockSpec((1, tp), lambda t: (0, t))]
                 + [pl.BlockSpec((tp, D), lambda t: (t, 0))] * 4,
        out_specs=(out_spec, out_spec),
        compiler_params=params,
        cost_estimate=pos_cost,
    )(w2d, u_i1, u_j1, u_i2, u_jp2)

    neg_cost = pl.CostEstimate(
        flops=int(2 * D * N + 8 * N),
        transcendentals=int(2 * N),
        bytes_accessed=int(2 * D * N * u_in.dtype.itemsize + 4))
    second_neg = pl.pallas_call(
        functools.partial(_neg_kernel, n_valid=N),
        out_shape=jax.ShapeDtypeStruct((1, 1), jnp.float32),
        grid=(pl.cdiv(N, tn),),
        in_specs=[pl.BlockSpec((tn, D), lambda t: (t, 0))] * 2,
        out_specs=out_spec,
        compiler_params=params,
        cost_estimate=neg_cost,
    )(u_in, u_jpn)

    return first[0, 0], (second_pos + second_neg)[0, 0]


def line_forward(params, batch_data, *, tile_e=4096):
    """Reproduces LINE.forward: returns {'first': scalar, 'second': scalar}."""
    embed_1 = params["embed_1"]
    embed_2 = params["embed_2"]
    embed_2_context = params["embed_2_context"]

    pos_edge = batch_data["pos"]                     # (P, 2) int32
    pos_edge_w = batch_data["pos_w"].astype(jnp.float32)   # (P,)
    neg_edge = batch_data["neg"]                     # (N, 2) int32

    pos_from_, pos_to_ = pos_edge[:, 0], pos_edge[:, 1]
    neg_from_, neg_to_ = neg_edge[:, 0], neg_edge[:, 1]

    # Embedding row gathers stay as XLA glue feeding the kernels; arrays are
    # passed in their stored dtype and upcast in-kernel.
    # TODO(synk): fuse these gathers into the kernel (see header TODO).
    u_i1 = embed_1[pos_from_]                # (P, D)
    u_j1 = embed_1[pos_to_]                  # (P, D)
    u_i2 = embed_2[pos_from_]                # (P, D)
    u_jp2 = embed_2_context[pos_to_]         # (P, D)
    u_in = embed_2[neg_from_]                # (N, D)
    u_jpn = embed_2_context[neg_to_]         # (N, D)

    first, second = line_losses_pallas(
        u_i1, u_j1, pos_edge_w, u_i2, u_jp2, u_in, u_jpn, tile_e=tile_e)
    return {"first": first, "second": second}


def line_forward_ref(params, batch_data):
    """Pure-JAX reference for correctness checking."""
    e1, e2, e2c = params["embed_1"], params["embed_2"], params["embed_2_context"]
    pos, w, neg = batch_data["pos"], batch_data["pos_w"], batch_data["neg"]
    pf, pt = pos[:, 0], pos[:, 1]
    nf, nt = neg[:, 0], neg[:, 1]

    dot1 = jnp.sum(e1[pf] * e1[pt], axis=1)
    first = -jnp.sum(w * jnp.log(jax.nn.sigmoid(dot1)))

    dot_pos = jnp.sum(e2[pf] * e2c[pt], axis=1)
    dot_neg = jnp.sum(e2[nf] * e2c[nt], axis=1)
    second = -(jnp.sum(jnp.log(jax.nn.sigmoid(dot_pos)))
               + jnp.sum(jnp.log(jax.nn.sigmoid(-dot_neg))))
    return {"first": first, "second": second}


if __name__ == "__main__":
    n_node, embed_dim = 64, 32
    n_pos, n_neg = 200, 300          # deliberately unequal + non-tile-aligned

    key = jax.random.PRNGKey(0)
    k1, k2, k3, k4, k5, k6 = jax.random.split(key, 6)

    params = {
        "embed_1": 0.1 * jax.random.normal(k1, (n_node, embed_dim), jnp.float32),
        "embed_2": 0.1 * jax.random.normal(k2, (n_node, embed_dim), jnp.float32),
        "embed_2_context": 0.1 * jax.random.normal(k3, (n_node, embed_dim), jnp.float32),
    }
    batch_data = {
        "pos": jax.random.randint(k4, (n_pos, 2), 0, n_node, jnp.int32),
        "pos_w": jax.random.uniform(k5, (n_pos,), jnp.float32, 0.1, 1.0),
        "neg": jax.random.randint(k6, (n_neg, 2), 0, n_node, jnp.int32),
    }

    ref = line_forward_ref(params, batch_data)

    # tile_e=128 exercises multi-tile accumulation + ragged tails; the default
    # path exercises tile clamping to the stream length.
    for te in (128, 4096):
        out = line_forward(params, batch_data, tile_e=te)
        out = jax.tree_util.tree_map(jax.block_until_ready, out)
        assert jnp.allclose(out["first"], ref["first"], rtol=1e-4, atol=1e-4), \
            (te, out["first"], ref["first"])
        assert jnp.allclose(out["second"], ref["second"], rtol=1e-4, atol=1e-4), \
            (te, out["second"], ref["second"])

    print("KERNEL_OK")
</pallas_src>

<mosaic_0001>
module attributes {stable_mosaic.version = 11 : i64} {
  func.func @_pos_kernel(%arg0: i32, %arg1: memref<1x128xf32, #tpu.memory_space<vmem>>, %arg2: memref<128x32xf32, #tpu.memory_space<vmem>>, %arg3: memref<128x32xf32, #tpu.memory_space<vmem>>, %arg4: memref<128x32xf32, #tpu.memory_space<vmem>>, %arg5: memref<128x32xf32, #tpu.memory_space<vmem>>, %arg6: memref<1x1xf32, #tpu.memory_space<vmem>>, %arg7: memref<1x1xf32, #tpu.memory_space<vmem>>) attributes {dimension_semantics = [#tpu.dimension_semantics<arbitrary>], iteration_bounds = array<i64: 2>, scalar_prefetch = 0 : i64, scratch_operands = 0 : i64, tpu.core_type = #tpu.core_type<tc>, window_params = [{transform_indices = @transform_0, window_bounds = array<i64: 1, 128>}, {transform_indices = @transform_1, window_bounds = array<i64: 128, 32>}, {transform_indices = @transform_2, window_bounds = array<i64: 128, 32>}, {transform_indices = @transform_3, window_bounds = array<i64: 128, 32>}, {transform_indices = @transform_4, window_bounds = array<i64: 128, 32>}, {pipeline_mode = #tpu.pipeline_mode<synchronous>, transform_indices = @transform_5, window_bounds = array<i64: 1, 1>}, {pipeline_mode = #tpu.pipeline_mode<synchronous>, transform_indices = @transform_6, window_bounds = array<i64: 1, 1>}]} {
    %c0_i32 = arith.constant 0 : i32
    %0 = arith.cmpi eq, %arg0, %c0_i32 : i32
    %1 = arith.extui %0 : i1 to i32
    %c0_i32_0 = arith.constant 0 : i32
    %2 = arith.cmpi ne, %1, %c0_i32_0 : i32
    scf.if %2 {
      %cst_34 = arith.constant 0.000000e+00 : f32
      %69 = vector.broadcast %cst_34 : f32 to vector<1x1xf32>
      %c0_35 = arith.constant 0 : index
      %c0_36 = arith.constant 0 : index
      %70 = vector.load %arg6[%c0_35, %c0_36] : memref<1x1xf32, #tpu.memory_space<vmem>>, vector<1x1xf32>
      tpu.vector_store %arg6[%c0_35, %c0_36], %69 {strides = array<i32>} : memref<1x1xf32, #tpu.memory_space<vmem>>, vector<1x1xf32>,
      %cst_37 = arith.constant 0.000000e+00 : f32
      %71 = vector.broadcast %cst_37 : f32 to vector<1x1xf32>
      %c0_38 = arith.constant 0 : index
      %c0_39 = arith.constant 0 : index
      %72 = vector.load %arg7[%c0_38, %c0_39] : memref<1x1xf32, #tpu.memory_space<vmem>>, vector<1x1xf32>
      tpu.vector_store %arg7[%c0_38, %c0_39], %71 {strides = array<i32>} : memref<1x1xf32, #tpu.memory_space<vmem>>, vector<1x1xf32>,
    } else {
    }
    %c128_i32 = arith.constant 128 : i32
    %3 = arith.muli %arg0, %c128_i32 : i32
    %4 = tpu.iota {dimensions = array<i32: 0>} : vector<128x1xi32>
    %5 = vector.broadcast %3 : i32 to vector<128x1xi32>
    %6 = arith.addi %5, %4 : vector<128x1xi32>
    %c200_i32 = arith.constant 200 : i32
    %7 = vector.broadcast %c200_i32 : i32 to vector<128x1xi32>
    %8 = arith.cmpi slt, %6, %7 : vector<128x1xi32>
    %9 = tpu.iota {dimensions = array<i32: 1>} : vector<1x128xi32>
    %10 = vector.broadcast %3 : i32 to vector<1x128xi32>
    %11 = arith.addi %10, %9 : vector<1x128xi32>
    %c200_i32_1 = arith.constant 200 : i32
    %12 = vector.broadcast %c200_i32_1 : i32 to vector<1x128xi32>
    %13 = arith.cmpi slt, %11, %12 : vector<1x128xi32>
    %c0 = arith.constant 0 : index
    %c0_2 = arith.constant 0 : index
    %14 = vector.load %arg2[%c0, %c0_2] : memref<128x32xf32, #tpu.memory_space<vmem>>, vector<128x32xf32>
    %c0_3 = arith.constant 0 : index
    %c0_4 = arith.constant 0 : index
    %15 = vector.load %arg3[%c0_3, %c0_4] : memref<128x32xf32, #tpu.memory_space<vmem>>, vector<128x32xf32>
    %c0_5 = arith.constant 0 : index
    %c0_6 = arith.constant 0 : index
    %16 = vector.load %arg4[%c0_5, %c0_6] : memref<128x32xf32, #tpu.memory_space<vmem>>, vector<128x32xf32>
    %c0_7 = arith.constant 0 : index
    %c0_8 = arith.constant 0 : index
    %17 = vector.load %arg5[%c0_7, %c0_8] : memref<128x32xf32, #tpu.memory_space<vmem>>, vector<128x32xf32>
    %18 = arith.mulf %14, %15 : vector<128x32xf32>
    %cst = arith.constant dense<0.000000e+00> : vector<128xf32>
    %19 = vector.multi_reduction <add>, %18, %cst [1] : vector<128x32xf32> to vector<128xf32>
    %20 = vector.shape_cast %19 : vector<128xf32> to vector<128x1xf32>
    %21 = arith.mulf %16, %17 : vector<128x32xf32>
    %cst_9 = arith.constant dense<0.000000e+00> : vector<128xf32>
    %22 = vector.multi_reduction <add>, %21, %cst_9 [1] : vector<128x32xf32> to vector<128xf32>
    %23 = vector.shape_cast %22 : vector<128xf32> to vector<128x1xf32>
    %cst_10 = arith.constant 0.000000e+00 : f32
    %24 = vector.broadcast %cst_10 : f32 to vector<128x1xf32>
    %25 = arith.select %8, %20, %24 : vector<128x1xi1>, vector<128x1xf32>
    %cst_11 = arith.constant 0.000000e+00 : f32
    %26 = vector.broadcast %cst_11 : f32 to vector<128x1xf32>
    %27 = arith.select %8, %23, %26 : vector<128x1xi1>, vector<128x1xf32>
    %c0_12 = arith.constant 0 : index
    %c0_13 = arith.constant 0 : index
    %28 = vector.load %arg1[%c0_12, %c0_13] : memref<1x128xf32, #tpu.memory_space<vmem>>, vector<1x128xf32>
    %cst_14 = arith.constant 0.000000e+00 : f32
    %29 = vector.broadcast %cst_14 : f32 to vector<1x128xf32>
    %30 = arith.select %13, %28, %29 : vector<1x128xi1>, vector<1x128xf32>
    %c0_15 = arith.constant 0 : index
    %c0_16 = arith.constant 0 : index
    %31 = vector.load %arg6[%c0_15, %c0_16] : memref<1x1xf32, #tpu.memory_space<vmem>>, vector<1x1xf32>
    %cst_17 = arith.constant 0.000000e+00 : f32
    %32 = vector.broadcast %cst_17 : f32 to vector<128x1xf32>
    %33 = arith.minimumf %25, %32 : vector<128x1xf32>
    %34 = math.absf %25 : vector<128x1xf32>
    %cst_18 = arith.constant 0.000000e+00 : f32
    %35 = vector.broadcast %cst_18 : f32 to vector<128x1xf32>
    %36 = arith.subf %35, %34 : vector<128x1xf32>
    %37 = math.exp %36 : vector<128x1xf32>
    %cst_19 = arith.constant 1.000000e+00 : f32
    %38 = vector.broadcast %cst_19 : f32 to vector<128x1xf32>
    %39 = arith.addf %38, %37 : vector<128x1xf32>
    %40 = math.log %39 : vector<128x1xf32>
    %41 = arith.subf %33, %40 : vector<128x1xf32>
    %cst_20 = arith.constant dense<0.000000e+00> : vector<1x1xf32>
    %42 = tpu.matmul %30, %41, %cst_20 {dimension_numbers = #tpu.dot_dimension_numbers<[1], [0], [0], [1], [0, 0, 1, 1], [], []>} : vector<1x128xf32>, vector<128x1xf32>, vector<1x1xf32> -> vector<1x1xf32>
    %cst_21 = arith.constant 0.000000e+00 : f32
    %43 = vector.broadcast %cst_21 : f32 to vector<1x1xf32>
    %44 = arith.subf %43, %42 : vector<1x1xf32>
    %45 = arith.addf %31, %44 : vector<1x1xf32>
    %c0_22 = arith.constant 0 : index
    %c0_23 = arith.constant 0 : index
    %46 = vector.load %arg6[%c0_22, %c0_23] : memref<1x1xf32, #tpu.memory_space<vmem>>, vector<1x1xf32>
    tpu.vector_store %arg6[%c0_22, %c0_23], %45 {strides = array<i32>} : memref<1x1xf32, #tpu.memory_space<vmem>>, vector<1x1xf32>,
    %c0_24 = arith.constant 0 : index
    %c0_25 = arith.constant 0 : index
    %47 = vector.load %arg7[%c0_24, %c0_25] : memref<1x1xf32, #tpu.memory_space<vmem>>, vector<1x1xf32>
    %cst_26 = arith.constant 0.000000e+00 : f32
    %48 = vector.broadcast %cst_26 : f32 to vector<128x1xf32>
    %49 = arith.minimumf %27, %48 : vector<128x1xf32>
    %50 = math.absf %27 : vector<128x1xf32>
    %cst_27 = arith.constant 0.000000e+00 : f32
    %51 = vector.broadcast %cst_27 : f32 to vector<128x1xf32>
    %52 = arith.subf %51, %50 : vector<128x1xf32>
    %53 = math.exp %52 : vector<128x1xf32>
    %cst_28 = arith.constant 1.000000e+00 : f32
    %54 = vector.broadcast %cst_28 : f32 to vector<128x1xf32>
    %55 = arith.addf %54, %53 : vector<128x1xf32>
    %56 = math.log %55 : vector<128x1xf32>
    %57 = arith.subf %49, %56 : vector<128x1xf32>
    %cst_29 = arith.constant 0.000000e+00 : f32
    %58 = vector.broadcast %cst_29 : f32 to vector<128x1xf32>
    %59 = arith.select %8, %57, %58 : vector<128x1xi1>, vector<128x1xf32>
    %60 = vector.shape_cast %59 : vector<128x1xf32> to vector<1x128x1xf32>
    %cst_30 = arith.constant dense<0.000000e+00> : vector<1xf32>
    %61 = vector.multi_reduction <add>, %60, %cst_30 [1, 2] : vector<1x128x1xf32> to vector<1xf32>
    %62 = vector.shape_cast %61 : vector<1xf32> to vector<1x1x1xf32>
    %63 = vector.extract %62[0, 0, 0] : f32 from vector<1x1x1xf32>
    %64 = vector.broadcast %63 : f32 to vector<1x1xf32>
    %cst_31 = arith.constant 0.000000e+00 : f32
    %65 = vector.broadcast %cst_31 : f32 to vector<1x1xf32>
    %66 = arith.subf %65, %64 : vector<1x1xf32>
    %67 = arith.addf %47, %66 : vector<1x1xf32>
    %c0_32 = arith.constant 0 : index
    %c0_33 = arith.constant 0 : index
    %68 = vector.load %arg7[%c0_32, %c0_33] : memref<1x1xf32, #tpu.memory_space<vmem>>, vector<1x1xf32>
    tpu.vector_store %arg7[%c0_32, %c0_33], %67 {strides = array<i32>} : memref<1x1xf32, #tpu.memory_space<vmem>>, vector<1x1xf32>,
    return
  }
  func.func @transform_0(%arg0: i32) -> (i32, i32) {
    %c0_i32 = arith.constant 0 : i32
    %c0_i32_0 = arith.constant 0 : i32
    return %c0_i32, %arg0 : i32, i32
  }
  func.func @transform_1(%arg0: i32) -> (i32, i32) {
    %c0_i32 = arith.constant 0 : i32
    %c0_i32_0 = arith.constant 0 : i32
    return %arg0, %c0_i32 : i32, i32
  }
  func.func @transform_2(%arg0: i32) -> (i32, i32) {
    %c0_i32 = arith.constant 0 : i32
    %c0_i32_0 = arith.constant 0 : i32
    return %arg0, %c0_i32 : i32, i32
  }
  func.func @transform_3(%arg0: i32) -> (i32, i32) {
    %c0_i32 = arith.constant 0 : i32
    %c0_i32_0 = arith.constant 0 : i32
    return %arg0, %c0_i32 : i32, i32
  }
  func.func @transform_4(%arg0: i32) -> (i32, i32) {
    %c0_i32 = arith.constant 0 : i32
    %c0_i32_0 = arith.constant 0 : i32
    return %arg0, %c0_i32 : i32, i32
  }
  func.func @transform_5(%arg0: i32) -> (i32, i32) {
    %c0_i32 = arith.constant 0 : i32
    %c0_i32_0 = arith.constant 0 : i32
    %c0_i32_1 = arith.constant 0 : i32
    return %c0_i32, %c0_i32_0 : i32, i32
  }
  func.func @transform_6(%arg0: i32) -> (i32, i32) {
    %c0_i32 = arith.constant 0 : i32
    %c0_i32_0 = arith.constant 0 : i32
    %c0_i32_1 = arith.constant 0 : i32
    return %c0_i32, %c0_i32_0 : i32, i32
  }
}

</mosaic_0001>

<llo_original>
// kernel: tpu_custom_call.1
$region0: #{tpu_custom_call.1}
  #allocation0 [shape = 'u32[]', space=smem, size = 0x4, offset = 0x4, fixed_abs, tag = 'smem constant byte address 0x4 - core index']
  #allocation1 [shape = 'u32[144,128]{1,0:T(1,128)}', space=vmem, size = 0x12000, scoped, tag = 'internal scratch']
  %s0 = inlined_call_operand.vmem [shape: f32[1,200], index: 0, kind: input, shape index: {}]
  %s1 = inlined_call_operand.vmem [shape: f32[200,32], index: 1, kind: input, shape index: {}]
  %s2 = inlined_call_operand.vmem [shape: f32[200,32], index: 2, kind: input, shape index: {}]
  %s3 = inlined_call_operand.vmem [shape: f32[200,32], index: 3, kind: input, shape index: {}]
  %s4 = inlined_call_operand.vmem [shape: f32[200,32], index: 4, kind: input, shape index: {}]
  %s5 = inlined_call_operand.hbm [shape: f32[1,1], index: 5, kind: output, shape index: {0}]
  %s6 = inlined_call_operand.hbm [shape: f32[1,1], index: 6, kind: output, shape index: {1}]
  %7 = xla_tuple %s5, %s6
  %s8 = sld [smem:[#allocation0]]
  $region65: #{tpu_custom_call.1} parent=0
    _
  %s10 = ssub.s32 1, %s8
  %s11 = scalar_select 0, %s10, %s8
  $region1: #{tpu_custom_call.1} parent=0
    #allocation2 [shape = 'u8[512]{0}', space=vmem, size = 0x400, scoped, tag = 'output window, operand 0, single buffered']
    #allocation3 [shape = 's32[2]{0}', space=sflag, size = 0x8, scoped, tag = 'scoped memory for tpu_custom_call.1']
    #allocation4 [shape = 'u8[512]{0}', space=vmem, size = 0x400, scoped, tag = 'output window, operand 1, single buffered']
    #allocation5 [shape = 's32[1]{0}', space=sflag, size = 0x4, scoped, tag = 'scoped memory for tpu_custom_call.1']
    %12 = vsyncpa [#allocation3], 0
    %13 = vsyncpa [#allocation5], 0
    loop: start=0, step=1, limit=4
    $region2: #{tpu_custom_call.1} parent=1 // loop_pre_header
      _
    $region3: #{tpu_custom_call.1} parent=1 // loop_header
      %s15 = sphi 0, %s19
      %p16 = scmp.ge.s32.totalorder %s15, 4
      %s25 = sphi 0, %s27
      %s28 = sphi 0, %s25
      %s29 = sphi 0, %s28
      %s45 = sphi 0, %s29
      %s51 = sphi 0, %s53
      %s54 = sphi 0, %s51
      %s55 = sphi 0, %s54
      %s71 = sphi 0, %s55
      %s77 = sphi 0, %s79
      %s80 = sphi 0, %s77
      %s81 = sphi 0, %s80
      %s97 = sphi 0, %s81
      %s103 = sphi 0, %s105
      %s106 = sphi 0, %s103
      %s107 = sphi 0, %s106
      %s123 = sphi 0, %s107
      %s129 = sphi 0, %s131
      %s132 = sphi 0, %s129
      %s133 = sphi 0, %s132
      %s149 = sphi 0, %s133
      %s153 = sphi 0, %s153
      %s155 = sphi 0, %s153
      %s156 = sphi 0, %s155
      %s170 = sphi 0, %s156
      %s174 = sphi 0, %s174
      %s176 = sphi 0, %s174
      %s177 = sphi 0, %s176
      %s191 = sphi 0, %s177
    $region4: #{tpu_custom_call.1} parent=1 // loop_header_branch
      %18 = sbr.rel (%p16) target = $region8
    $region5: #{tpu_custom_call.1} parent=1 // loop_body
      %s20 = ssub.s32 %s15, 1
      %s21 = ssub.s32 %s15, 2
      %s22 = sadd.s32 %s15, 1
      %s23 = ssub.s32 %s15, %s22
      %p24 = scmp.eq.s32.totalorder %s23, 0
      %s26 = sadd.s32 %s25, 1
      %s27 = scalar_select %p24, %s25, %s26
      %p30 = pneg %p24
      %p31 = scmp.eq.s32.totalorder %s15, 1
      %p32 = por %p30, %p31
      %p33 = scmp.ne.s32.totalorder %s25, %s28
      %p34 = scmp.eq.s32.totalorder %s15, 0
      %p35 = por %p33, %p34
      %p36 = scmp.ne.s32.totalorder %s25, %s28
      %p37 = scmp.eq.s32.totalorder %s20, 1
      %p38 = por %p36, %p37
      %p39 = scmp.ne.s32.totalorder %s28, %s29
      %p40 = scmp.eq.s32.totalorder %s20, 0
      %p41 = por %p39, %p40
      %p42 = scmp.ne.s32.totalorder %s28, %s29
      %p43 = scmp.eq.s32.totalorder %s21, 1
      %p44 = por %p42, %p43
      %p46 = scmp.ne.s32.totalorder %s29, %s45
      %p47 = scmp.eq.s32.totalorder %s21, 0
      %p48 = por %p46, %p47
      %s49 = ssub.s32 %s15, %s22
      %p50 = scmp.eq.s32.totalorder %s49, 0
      %s52 = sadd.s32 %s51, 1
      %s53 = scalar_select %p50, %s51, %s52
      %p56 = pneg %p50
      %p57 = scmp.eq.s32.totalorder %s15, 1
      %p58 = por %p56, %p57
      %p59 = scmp.ne.s32.totalorder %s51, %s54
      %p60 = scmp.eq.s32.totalorder %s15, 0
      %p61 = por %p59, %p60
      %p62 = scmp.ne.s32.totalorder %s51, %s54
      %p63 = scmp.eq.s32.totalorder %s20, 1
      %p64 = por %p62, %p63
      %p65 = scmp.ne.s32.totalorder %s54, %s55
      %p66 = scmp.eq.s32.totalorder %s20, 0
      %p67 = por %p65, %p66
      %p68 = scmp.ne.s32.totalorder %s54, %s55
      %p69 = scmp.eq.s32.totalorder %s21, 1
      %p70 = por %p68, %p69
      %p72 = scmp.ne.s32.totalorder %s55, %s71
      %p73 = scmp.eq.s32.totalorder %s21, 0
      %p74 = por %p72, %p73
      %s75 = ssub.s32 %s15, %s22
      %p76 = scmp.eq.s32.totalorder %s75, 0
      %s78 = sadd.s32 %s77, 1
      %s79 = scalar_select %p76, %s77, %s78
      %p82 = pneg %p76
      %p83 = scmp.eq.s32.totalorder %s15, 1
      %p84 = por %p82, %p83
      %p85 = scmp.ne.s32.totalorder %s77, %s80
      %p86 = scmp.eq.s32.totalorder %s15, 0
      %p87 = por %p85, %p86
      %p88 = scmp.ne.s32.totalorder %s77, %s80
      %p89 = scmp.eq.s32.totalorder %s20, 1
      %p90 = por %p88, %p89
      %p91 = scmp.ne.s32.totalorder %s80, %s81
      %p92 = scmp.eq.s32.totalorder %s20, 0
      %p93 = por %p91, %p92
      %p94 = scmp.ne.s32.totalorder %s80, %s81
      %p95 = scmp.eq.s32.totalorder %s21, 1
      %p96 = por %p94, %p95
      %p98 = scmp.ne.s32.totalorder %s81, %s97
      %p99 = scmp.eq.s32.totalorder %s21, 0
      %p100 = por %p98, %p99
      %s101 = ssub.s32 %s15, %s22
      %p102 = scmp.eq.s32.totalorder %s101, 0
      %s104 = sadd.s32 %s103, 1
      %s105 = scalar_select %p102, %s103, %s104
      %p108 = pneg %p102
      %p109 = scmp.eq.s32.totalorder %s15, 1
      %p110 = por %p108, %p109
      %p111 = scmp.ne.s32.totalorder %s103, %s106
      %p112 = scmp.eq.s32.totalorder %s15, 0
      %p113 = por %p111, %p112
      %p114 = scmp.ne.s32.totalorder %s103, %s106
      %p115 = scmp.eq.s32.totalorder %s20, 1
      %p116 = por %p114, %p115
      %p117 = scmp.ne.s32.totalorder %s106, %s107
      %p118 = scmp.eq.s32.totalorder %s20, 0
      %p119 = por %p117, %p118
      %p120 = scmp.ne.s32.totalorder %s106, %s107
      %p121 = scmp.eq.s32.totalorder %s21, 1
      %p122 = por %p120, %p121
      %p124 = scmp.ne.s32.totalorder %s107, %s123
      %p125 = scmp.eq.s32.totalorder %s21, 0
      %p126 = por %p124, %p125
      %s127 = ssub.s32 %s15, %s22
      %p128 = scmp.eq.s32.totalorder %s127, 0
      %s130 = sadd.s32 %s129, 1
      %s131 = scalar_select %p128, %s129, %s130
      %p134 = pneg %p128
      %p135 = scmp.eq.s32.totalorder %s15, 1
      %p136 = por %p134, %p135
      %p137 = scmp.ne.s32.totalorder %s129, %s132
      %p138 = scmp.eq.s32.totalorder %s15, 0
      %p139 = por %p137, %p138
      %p140 = scmp.ne.s32.totalorder %s129, %s132
      %p141 = scmp.eq.s32.totalorder %s20, 1
      %p142 = por %p140, %p141
      %p143 = scmp.ne.s32.totalorder %s132, %s133
      %p144 = scmp.eq.s32.totalorder %s20, 0
      %p145 = por %p143, %p144
      %p146 = scmp.ne.s32.totalorder %s132, %s133
      %p147 = scmp.eq.s32.totalorder %s21, 1
      %p148 = por %p146, %p147
      %p150 = scmp.ne.s32.totalorder %s133, %s149
      %p151 = scmp.eq.s32.totalorder %s21, 0
      %p152 = por %p150, %p151
      %s154 = sadd.s32 %s153, 1
      %p157 = scmp.eq.s32.totalorder %s15, 1
      %p158 = scmp.ne.s32.totalorder %s153, %s155
      %p159 = scmp.eq.s32.totalorder %s15, 0
      %p160 = por %p158, %p159
      %p161 = scmp.ne.s32.totalorder %s153, %s155
      %p162 = scmp.eq.s32.totalorder %s20, 1
      %p163 = por %p161, %p162
      %p164 = scmp.ne.s32.totalorder %s155, %s156
      %p165 = scmp.eq.s32.totalorder %s20, 0
      %p166 = por %p164, %p165
      %p167 = scmp.ne.s32.totalorder %s155, %s156
      %p168 = scmp.eq.s32.totalorder %s21, 1
      %p169 = por %p167, %p168
      %p171 = scmp.ne.s32.totalorder %s156, %s170
      %p172 = scmp.eq.s32.totalorder %s21, 0
      %p173 = por %p171, %p172
      %s175 = sadd.s32 %s174, 1
      %p178 = scmp.eq.s32.totalorder %s15, 1
      %p179 = scmp.ne.s32.totalorder %s174, %s176
      %p180 = scmp.eq.s32.totalorder %s15, 0
      %p181 = por %p179, %p180
      %p182 = scmp.ne.s32.totalorder %s174, %s176
      %p183 = scmp.eq.s32.totalorder %s20, 1
      %p184 = por %p182, %p183
      %p185 = scmp.ne.s32.totalorder %s176, %s177
      %p186 = scmp.eq.s32.totalorder %s20, 0
      %p187 = por %p185, %p186
      %p188 = scmp.ne.s32.totalorder %s176, %s177
      %p189 = scmp.eq.s32.totalorder %s21, 1
      %p190 = por %p188, %p189
      %p192 = scmp.ne.s32.totalorder %s177, %s191
      %p193 = scmp.eq.s32.totalorder %s21, 0
      %p194 = por %p192, %p193
      %p195 = scmp.le.s32.totalorder 1, %s15
      %p196 = scmp.lt.s32.totalorder %s15, 3
      %p197 = pnand %p195, %p196
      %p198 = pneg %p197
      // Predicated region
      $region9: #{tpu_custom_call.1} parent=5 // pred_check
        _
      $region10: #{tpu_custom_call.1} parent=5 // pred_check_branch
        %200 = sbr.rel (%p197) target = $region12
      $region11: #{tpu_custom_call.1} parent=5 // pred_region
        %s201 = ssub.s32 %s15, 1
      $region12: #{tpu_custom_call.1} parent=5 // pred_fallthru
        _
      %p202 = scmp.lt.s32.totalorder %s15, 2
      // Predicated region
      $region13: #{tpu_custom_call.1} parent=5 // pred_check
        %p203 = pneg %p202
      $region14: #{tpu_custom_call.1} parent=5 // pred_check_branch
        %205 = sbr.rel (%p203) target = $region16
      $region15: #{tpu_custom_call.1} parent=5 // pred_region
        // Predicated region
        $region17: #{tpu_custom_call.1} parent=15 // pred_check
          %p206 = pneg %p35
        $region18: #{tpu_custom_call.1} parent=15 // pred_check_branch
          %208 = sbr.rel (%p206) target = $region20
        $region19: #{tpu_custom_call.1} parent=15 // pred_region
          %p209 = scmp.lt.s32.totalorder %s15, 1
          %s210 = scalar_select %p209, %s15, 1
          %s211 = scalar_lea.vmem %s0, %s210
        $region20: #{tpu_custom_call.1} parent=15 // pred_fallthru
          _
        // Predicated region
        $region21: #{tpu_custom_call.1} parent=15 // pred_check
          %p212 = pneg %p61
        $region22: #{tpu_custom_call.1} parent=15 // pred_check_branch
          %214 = sbr.rel (%p212) target = $region24
        $region23: #{tpu_custom_call.1} parent=15 // pred_region
          %s215 = smul.u32 16, %s15
          %s216 = ssub.s32 25, %s215
          %p217 = scmp.lt.s32.totalorder %s216, 16
          %s218 = scalar_select %p217, %s216, 16
          %s219 = smul.u32 128, %s218
          %p220 = scmp.lt.s32.totalorder %s215, 24
          %s221 = scalar_select %p220, %s215, 24
          %s222 = smul.addr %s221, 8
          %s223 = scalar_lea.vmem %s1, %s222
          %s224 = smul.u32 16, %s15
          %s225 = ssub.s32 25, %s224
          %p226 = scmp.lt.s32.totalorder %s225, 16
          %s227 = scalar_select %p226, %s225, 16
          %s228 = smul.u32 128, %s227
        $region24: #{tpu_custom_call.1} parent=15 // pred_fallthru
          _
        // Predicated region
        $region25: #{tpu_custom_call.1} parent=15 // pred_check
          %p229 = pneg %p87
        $region26: #{tpu_custom_call.1} parent=15 // pred_check_branch
          %231 = sbr.rel (%p229) target = $region28
        $region27: #{tpu_custom_call.1} parent=15 // pred_region
          %s232 = smul.u32 16, %s15
          %s233 = ssub.s32 25, %s232
          %p234 = scmp.lt.s32.totalorder %s233, 16
          %s235 = scalar_select %p234, %s233, 16
          %s236 = smul.u32 128, %s235
          %p237 = scmp.lt.s32.totalorder %s232, 24
          %s238 = scalar_select %p237, %s232, 24
          %s239 = smul.addr %s238, 8
          %s240 = scalar_lea.vmem %s2, %s239
          %s241 = smul.u32 16, %s15
          %s242 = ssub.s32 25, %s241
          %p243 = scmp.lt.s32.totalorder %s242, 16
          %s244 = scalar_select %p243, %s242, 16
          %s245 = smul.u32 128, %s244
        $region28: #{tpu_custom_call.1} parent=15 // pred_fallthru
          _
        // Predicated region
        $region29: #{tpu_custom_call.1} parent=15 // pred_check
          %p246 = pneg %p113
        $region30: #{tpu_custom_call.1} parent=15 // pred_check_branch
          %248 = sbr.rel (%p246) target = $region32
        $region31: #{tpu_custom_call.1} parent=15 // pred_region
          %s249 = smul.u32 16, %s15
          %s250 = ssub.s32 25, %s249
          %p251 = scmp.lt.s32.totalorder %s250, 16
          %s252 = scalar_select %p251, %s250, 16
          %s253 = smul.u32 128, %s252
          %p254 = scmp.lt.s32.totalorder %s249, 24
          %s255 = scalar_select %p254, %s249, 24
          %s256 = smul.addr %s255, 8
          %s257 = scalar_lea.vmem %s3, %s256
          %s258 = smul.u32 16, %s15
          %s259 = ssub.s32 25, %s258
          %p260 = scmp.lt.s32.totalorder %s259, 16
          %s261 = scalar_select %p260, %s259, 16
          %s262 = smul.u32 128, %s261
        $region32: #{tpu_custom_call.1} parent=15 // pred_fallthru
          _
        // Predicated region
        $region33: #{tpu_custom_call.1} parent=15 // pred_check
          %p263 = pneg %p139
        $region34: #{tpu_custom_call.1} parent=15 // pred_check_branch
          %265 = sbr.rel (%p263) target = $region36
        $region35: #{tpu_custom_call.1} parent=15 // pred_region
          %s266 = smul.u32 16, %s15
          %s267 = ssub.s32 25, %s266
          %p268 = scmp.lt.s32.totalorder %s267, 16
          %s269 = scalar_select %p268, %s267, 16
          %s270 = smul.u32 128, %s269
          %p271 = scmp.lt.s32.totalorder %s266, 24
          %s272 = scalar_select %p271, %s266, 24
          %s273 = smul.addr %s272, 8
          %s274 = scalar_lea.vmem %s4, %s273
          %s275 = smul.u32 16, %s15
          %s276 = ssub.s32 25, %s275
          %p277 = scmp.lt.s32.totalorder %s276, 16
          %s278 = scalar_select %p277, %s276, 16
          %s279 = smul.u32 128, %s278
        $region36: #{tpu_custom_call.1} parent=15 // pred_fallthru
          _
      $region16: #{tpu_custom_call.1} parent=5 // pred_fallthru
        _
      %p280 = scmp.le.s32.totalorder 1, %s15
      %p281 = scmp.lt.s32.totalorder %s15, 3
      %p282 = pnand %p280, %p281
      %p283 = pneg %p282
      // Predicated region
      $region37: #{tpu_custom_call.1} parent=5 // pred_check
        _
      $region38: #{tpu_custom_call.1} parent=5 // pred_check_branch
        %285 = sbr.rel (%p282) target = $region40
      $region39: #{tpu_custom_call.1} parent=5 // pred_region
        %s286 = ssub.s32 %s15, 1
        %p287 = scmp.lt.s32.totalorder %s20, 1
        %s288 = scalar_select %p287, %s20, 1
        %s289 = scalar_lea.vmem %s0, %s288
        %p290 = pneg %p41
        %p291 = pneg %p38
        %s292 = smul.u32 16, %s20
        %s293 = ssub.s32 25, %s292
        %p294 = scmp.lt.s32.totalorder %s293, 16
        %s295 = scalar_select %p294, %s293, 16
        %s296 = smul.u32 128, %s295
        %p297 = scmp.lt.s32.totalorder %s292, 24
        %s298 = scalar_select %p297, %s292, 24
        %s299 = smul.addr %s298, 8
        %s300 = scalar_lea.vmem %s1, %s299
        %p301 = pneg %p67
        %p302 = pneg %p64
        %s303 = smul.u32 16, %s20
        %s304 = ssub.s32 25, %s303
        %p305 = scmp.lt.s32.totalorder %s304, 16
        %s306 = scalar_select %p305, %s304, 16
        %s307 = smul.u32 128, %s306
        %p308 = scmp.lt.s32.totalorder %s303, 24
        %s309 = scalar_select %p308, %s303, 24
        %s310 = smul.addr %s309, 8
        %s311 = scalar_lea.vmem %s2, %s310
        %p312 = pneg %p93
        %p313 = pneg %p90
        %s314 = smul.u32 16, %s20
        %s315 = ssub.s32 25, %s314
        %p316 = scmp.lt.s32.totalorder %s315, 16
        %s317 = scalar_select %p316, %s315, 16
        %s318 = smul.u32 128, %s317
        %p319 = scmp.lt.s32.totalorder %s314, 24
        %s320 = scalar_select %p319, %s314, 24
        %s321 = smul.addr %s320, 8
        %s322 = scalar_lea.vmem %s3, %s321
        %p323 = pneg %p119
        %p324 = pneg %p116
        %s325 = smul.u32 16, %s20
        %s326 = ssub.s32 25, %s325
        %p327 = scmp.lt.s32.totalorder %s326, 16
        %s328 = scalar_select %p327, %s326, 16
        %s329 = smul.u32 128, %s328
        %p330 = scmp.lt.s32.totalorder %s325, 24
        %s331 = scalar_select %p330, %s325, 24
        %s332 = smul.addr %s331, 8
        %s333 = scalar_lea.vmem %s4, %s332
        %p334 = pneg %p145
        %p335 = pneg %p142
        %p336 = pneg %p166
        %p337 = pneg %p163
        %p338 = pneg %p187
        %p339 = pneg %p184
        %p340 = scmp.lt.s32.totalorder %s20, 1
        %s341 = scalar_select %p340, %s20, 1
        %s342 = scalar_lea.vmem %s0, %s341
        %s343 = smul.u32 16, %s20
        %s344 = ssub.s32 25, %s343
        %p345 = scmp.lt.s32.totalorder %s344, 16
        %s346 = scalar_select %p345, %s344, 16
        %s347 = smul.u32 128, %s346
        %p348 = scmp.lt.s32.totalorder %s343, 24
        %s349 = scalar_select %p348, %s343, 24
        %s350 = smul.addr %s349, 8
        %s351 = scalar_lea.vmem %s1, %s350
        %s352 = smul.u32 16, %s20
        %s353 = ssub.s32 25, %s352
        %p354 = scmp.lt.s32.totalorder %s353, 16
        %s355 = scalar_select %p354, %s353, 16
        %s356 = smul.u32 128, %s355
        %s357 = smul.u32 16, %s20
        %s358 = ssub.s32 25, %s357
        %p359 = scmp.lt.s32.totalorder %s358, 16
        %s360 = scalar_select %p359, %s358, 16
        %s361 = smul.u32 128, %s360
        %p362 = scmp.lt.s32.totalorder %s357, 24
        %s363 = scalar_select %p362, %s357, 24
        %s364 = smul.addr %s363, 8
        %s365 = scalar_lea.vmem %s2, %s364
        %s366 = smul.u32 16, %s20
        %s367 = ssub.s32 25, %s366
        %p368 = scmp.lt.s32.totalorder %s367, 16
        %s369 = scalar_select %p368, %s367, 16
        %s370 = smul.u32 128, %s369
        %s371 = smul.u32 16, %s20
        %s372 = ssub.s32 25, %s371
        %p373 = scmp.lt.s32.totalorder %s372, 16
        %s374 = scalar_select %p373, %s372, 16
        %s375 = smul.u32 128, %s374
        %p376 = scmp.lt.s32.totalorder %s371, 24
        %s377 = scalar_select %p376, %s371, 24
        %s378 = smul.addr %s377, 8
        %s379 = scalar_lea.vmem %s3, %s378
        %s380 = smul.u32 16, %s20
        %s381 = ssub.s32 25, %s380
        %p382 = scmp.lt.s32.totalorder %s381, 16
        %s383 = scalar_select %p382, %s381, 16
        %s384 = smul.u32 128, %s383
        %s385 = smul.u32 16, %s20
        %s386 = ssub.s32 25, %s385
        %p387 = scmp.lt.s32.totalorder %s386, 16
        %s388 = scalar_select %p387, %s386, 16
        %s389 = smul.u32 128, %s388
        %p390 = scmp.lt.s32.totalorder %s385, 24
        %s391 = scalar_select %p390, %s385, 24
        %s392 = smul.addr %s391, 8
        %s393 = scalar_lea.vmem %s4, %s392
        %s394 = smul.u32 16, %s20
        %s395 = ssub.s32 25, %s394
        %p396 = scmp.lt.s32.totalorder %s395, 16
        %s397 = scalar_select %p396, %s395, 16
        %s398 = smul.u32 128, %s397
        %p399 = scmp.eq.s32.totalorder %s20, 0
        // Predicated region
        $region41: #{tpu_custom_call.1} parent=39 // pred_check
          %p400 = pneg %p399
        $region42: #{tpu_custom_call.1} parent=39 // pred_check_branch
          %402 = sbr.rel (%p400) target = $region44
        $region43: #{tpu_custom_call.1} parent=39 // pred_region
          %vm403 = vcmask 0
          %404 = vst.msk [vmem:[#allocation2] sm:$0x1] %vm403, 0.0
          %405 = vst.msk [vmem:[#allocation4] sm:$0x1] %vm403, 0.0
        $region44: #{tpu_custom_call.1} parent=39 // pred_fallthru
          _
        %s406 = smul.u32 %s20, 128
        %v407 = vlaneseq
        %v408 = vshrl.u32 %v407, 7
        %v409 = vadd.s32 %v408, 8
        %v410 = vadd.s32 %v408, 16
        %v411 = vadd.s32 %v408, 24
        %v412 = vadd.s32 %v408, 32
        %v413 = vadd.s32 %v408, 40
        %v414 = vadd.s32 %v408, 48
        %v415 = vadd.s32 %v408, 56
        %v416 = vadd.s32 %v408, 64
        %v417 = vadd.s32 %v408, 72
        %v418 = vadd.s32 %v408, 80
        %v419 = vadd.s32 %v408, 88
        %v420 = vadd.s32 %v408, 96
        %v421 = vadd.s32 %v408, 104
        %v422 = vadd.s32 %v408, 112
        %v423 = vadd.s32 %v408, 120
        %v424 = vstv %s406
        %v425 = vadd.s32 %v424, %v408
        %v426 = vadd.s32 %v424, %v409
        %v427 = vadd.s32 %v424, %v410
        %v428 = vadd.s32 %v424, %v411
        %v429 = vadd.s32 %v424, %v412
        %v430 = vadd.s32 %v424, %v413
        %v431 = vadd.s32 %v424, %v414
        %v432 = vadd.s32 %v424, %v415
        %v433 = vadd.s32 %v424, %v416
        %v434 = vadd.s32 %v424, %v417
        %v435 = vadd.s32 %v424, %v418
        %v436 = vadd.s32 %v424, %v419
        %v437 = vadd.s32 %v424, %v420
        %v438 = vadd.s32 %v424, %v421
        %v439 = vadd.s32 %v424, %v422
        %v440 = vadd.s32 %v424, %v423
        %vm441 = vcmp.lt.s32.totalorder %v425, 200
        %vm442 = vcmp.lt.s32.totalorder %v426, 200
        %vm443 = vcmp.lt.s32.totalorder %v427, 200
        %vm444 = vcmp.lt.s32.totalorder %v428, 200
        %vm445 = vcmp.lt.s32.totalorder %v429, 200
        %vm446 = vcmp.lt.s32.totalorder %v430, 200
        %vm447 = vcmp.lt.s32.totalorder %v431, 200
        %vm448 = vcmp.lt.s32.totalorder %v432, 200
        %vm449 = vcmp.lt.s32.totalorder %v433, 200
        %vm450 = vcmp.lt.s32.totalorder %v434, 200
        %vm451 = vcmp.lt.s32.totalorder %v435, 200
        %vm452 = vcmp.lt.s32.totalorder %v436, 200
        %vm453 = vcmp.lt.s32.totalorder %v437, 200
        %vm454 = vcmp.lt.s32.totalorder %v438, 200
        %vm455 = vcmp.lt.s32.totalorder %v439, 200
        %vm456 = vcmp.lt.s32.totalorder %v440, 200
        %v457 = vlaneseq
        %v458 = vand.u32 %v457, 127
        %v459 = vadd.s32 %v424, %v458
        %vm460 = vcmp.lt.s32.totalorder %v459, 200
        %v461 = vld [vmem:[%s351] sm:$0xff]
        %v462 = vld [vmem:[%s351 + $0x8] sm:$0xff]
        %v463 = vld [vmem:[%s351 + $0x10] sm:$0xff]
        %v464 = vld [vmem:[%s351 + $0x18] sm:$0xff]
        %v465 = vld [vmem:[%s351 + $0x20] sm:$0xff]
        %v466 = vld [vmem:[%s351 + $0x28] sm:$0xff]
        %v467 = vld [vmem:[%s351 + $0x30] sm:$0xff]
        %v468 = vld [vmem:[%s351 + $0x38] sm:$0xff]
        %v469 = vld [vmem:[%s351 + $0x40] sm:$0xff]
        %v470 = vld [vmem:[%s351 + $0x48] sm:$0xff]
        %v471 = vld [vmem:[%s351 + $0x50] sm:$0xff]
        %v472 = vld [vmem:[%s351 + $0x58] sm:$0xff]
        %v473 = vld [vmem:[%s351 + $0x60] sm:$0xff]
        %v474 = vld [vmem:[%s351 + $0x68] sm:$0xff]
        %v475 = vld [vmem:[%s351 + $0x70] sm:$0xff]
        %v476 = vld [vmem:[%s351 + $0x78] sm:$0xff]
        %v477 = vld [vmem:[%s365] sm:$0xff]
        %v478 = vld [vmem:[%s365 + $0x8] sm:$0xff]
        %v479 = vld [vmem:[%s365 + $0x10] sm:$0xff]
        %v480 = vld [vmem:[%s365 + $0x18] sm:$0xff]
        %v481 = vld [vmem:[%s365 + $0x20] sm:$0xff]
        %v482 = vld [vmem:[%s365 + $0x28] sm:$0xff]
        %v483 = vld [vmem:[%s365 + $0x30] sm:$0xff]
        %v484 = vld [vmem:[%s365 + $0x38] sm:$0xff]
        %v485 = vld [vmem:[%s365 + $0x40] sm:$0xff]
        %v486 = vld [vmem:[%s365 + $0x48] sm:$0xff]
        %v487 = vld [vmem:[%s365 + $0x50] sm:$0xff]
        %v488 = vld [vmem:[%s365 + $0x58] sm:$0xff]
        %v489 = vld [vmem:[%s365 + $0x60] sm:$0xff]
        %v490 = vld [vmem:[%s365 + $0x68] sm:$0xff]
        %v491 = vld [vmem:[%s365 + $0x70] sm:$0xff]
        %v492 = vld [vmem:[%s365 + $0x78] sm:$0xff]
        %v493 = vld [vmem:[%s379] sm:$0xff]
        %v494 = vld [vmem:[%s379 + $0x8] sm:$0xff]
        %v495 = vld [vmem:[%s379 + $0x10] sm:$0xff]
        %v496 = vld [vmem:[%s379 + $0x18] sm:$0xff]
        %v497 = vld [vmem:[%s379 + $0x20] sm:$0xff]
        %v498 = vld [vmem:[%s379 + $0x28] sm:$0xff]
        %v499 = vld [vmem:[%s379 + $0x30] sm:$0xff]
        %v500 = vld [vmem:[%s379 + $0x38] sm:$0xff]
        %v501 = vld [vmem:[%s379 + $0x40] sm:$0xff]
        %v502 = vld [vmem:[%s379 + $0x48] sm:$0xff]
        %v503 = vld [vmem:[%s379 + $0x50] sm:$0xff]
        %v504 = vld [vmem:[%s379 + $0x58] sm:$0xff]
        %v505 = vld [vmem:[%s379 + $0x60] sm:$0xff]
        %v506 = vld [vmem:[%s379 + $0x68] sm:$0xff]
        %v507 = vld [vmem:[%s379 + $0x70] sm:$0xff]
        %v508 = vld [vmem:[%s379 + $0x78] sm:$0xff]
        %v509 = vld [vmem:[%s393] sm:$0xff]
        %v510 = vld [vmem:[%s393 + $0x8] sm:$0xff]
        %v511 = vld [vmem:[%s393 + $0x10] sm:$0xff]
        %v512 = vld [vmem:[%s393 + $0x18] sm:$0xff]
        %v513 = vld [vmem:[%s393 + $0x20] sm:$0xff]
        %v514 = vld [vmem:[%s393 + $0x28] sm:$0xff]
        %v515 = vld [vmem:[%s393 + $0x30] sm:$0xff]
        %v516 = vld [vmem:[%s393 + $0x38] sm:$0xff]
        %v517 = vld [vmem:[%s393 + $0x40] sm:$0xff]
        %v518 = vld [vmem:[%s393 + $0x48] sm:$0xff]
        %v519 = vld [vmem:[%s393 + $0x50] sm:$0xff]
        %v520 = vld [vmem:[%s393 + $0x58] sm:$0xff]
        %v521 = vld [vmem:[%s393 + $0x60] sm:$0xff]
        %v522 = vld [vmem:[%s393 + $0x68] sm:$0xff]
        %v523 = vld [vmem:[%s393 + $0x70] sm:$0xff]
        %v524 = vld [vmem:[%s393 + $0x78] sm:$0xff]
        %v525 = vmul.f32 %v461, %v477
        %v526 = vmul.f32 %v462, %v478
        %v527 = vmul.f32 %v463, %v479
        %v528 = vmul.f32 %v464, %v480
        %v529 = vmul.f32 %v465, %v481
        %v530 = vmul.f32 %v466, %v482
        %v531 = vmul.f32 %v467, %v483
        %v532 = vmul.f32 %v468, %v484
        %v533 = vmul.f32 %v469, %v485
        %v534 = vmul.f32 %v470, %v486
        %v535 = vmul.f32 %v471, %v487
        %v536 = vmul.f32 %v472, %v488
        %v537 = vmul.f32 %v473, %v489
        %v538 = vmul.f32 %v474, %v490
        %v539 = vmul.f32 %v475, %v491
        %v540 = vmul.f32 %v476, %v492
        %vm541 = vcmask 261120
        %v542 = vsel %vm541, %v525, 0.0
        %543 = vadd.xlane.f32.xlu0 %v542
        %v544 = vpop.xlane.xlu0 %543
        %v545 = vsel %vm541, %v526, 0.0
        %546 = vadd.xlane.f32.xlu0 %v545
        %v547 = vpop.xlane.xlu0 %546
        %v548 = vsel %vm541, %v527, 0.0
        %549 = vadd.xlane.f32.xlu0 %v548
        %v550 = vpop.xlane.xlu0 %549
        %v551 = vsel %vm541, %v528, 0.0
        %552 = vadd.xlane.f32.xlu0 %v551
        %v553 = vpop.xlane.xlu0 %552
        %v554 = vsel %vm541, %v529, 0.0
        %555 = vadd.xlane.f32.xlu0 %v554
        %v556 = vpop.xlane.xlu0 %555
        %v557 = vsel %vm541, %v530, 0.0
        %558 = vadd.xlane.f32.xlu0 %v557
        %v559 = vpop.xlane.xlu0 %558
        %v560 = vsel %vm541, %v531, 0.0
        %561 = vadd.xlane.f32.xlu0 %v560
        %v562 = vpop.xlane.xlu0 %561
        %v563 = vsel %vm541, %v532, 0.0
        %564 = vadd.xlane.f32.xlu0 %v563
        %v565 = vpop.xlane.xlu0 %564
        %v566 = vsel %vm541, %v533, 0.0
        %567 = vadd.xlane.f32.xlu0 %v566
        %v568 = vpop.xlane.xlu0 %567
        %v569 = vsel %vm541, %v534, 0.0
        %570 = vadd.xlane.f32.xlu0 %v569
        %v571 = vpop.xlane.xlu0 %570
        %v572 = vsel %vm541, %v535, 0.0
        %573 = vadd.xlane.f32.xlu0 %v572
        %v574 = vpop.xlane.xlu0 %573
        %v575 = vsel %vm541, %v536, 0.0
        %576 = vadd.xlane.f32.xlu0 %v575
        %v577 = vpop.xlane.xlu0 %576
        %v578 = vsel %vm541, %v537, 0.0
        %579 = vadd.xlane.f32.xlu0 %v578
        %v580 = vpop.xlane.xlu0 %579
        %v581 = vsel %vm541, %v538, 0.0
        %582 = vadd.xlane.f32.xlu0 %v581
        %v583 = vpop.xlane.xlu0 %582
        %v584 = vsel %vm541, %v539, 0.0
        %585 = vadd.xlane.f32.xlu0 %v584
        %v586 = vpop.xlane.xlu0 %585
        %v587 = vsel %vm541, %v540, 0.0
        %588 = vadd.xlane.f32.xlu0 %v587
        %v589 = vpop.xlane.xlu0 %588
        %v590 = vmul.f32 %v493, %v509
        %v591 = vmul.f32 %v494, %v510
        %v592 = vmul.f32 %v495, %v511
        %v593 = vmul.f32 %v496, %v512
        %v594 = vmul.f32 %v497, %v513
        %v595 = vmul.f32 %v498, %v514
        %v596 = vmul.f32 %v499, %v515
        %v597 = vmul.f32 %v500, %v516
        %v598 = vmul.f32 %v501, %v517
        %v599 = vmul.f32 %v502, %v518
        %v600 = vmul.f32 %v503, %v519
        %v601 = vmul.f32 %v504, %v520
        %v602 = vmul.f32 %v505, %v521
        %v603 = vmul.f32 %v506, %v522
        %v604 = vmul.f32 %v507, %v523
        %v605 = vmul.f32 %v508, %v524
        %v606 = vsel %vm541, %v590, 0.0
        %607 = vadd.xlane.f32.xlu0 %v606
        %v608 = vpop.xlane.xlu0 %607
        %v609 = vsel %vm541, %v591, 0.0
        %610 = vadd.xlane.f32.xlu0 %v609
        %v611 = vpop.xlane.xlu0 %610
        %v612 = vsel %vm541, %v592, 0.0
        %613 = vadd.xlane.f32.xlu0 %v612
        %v614 = vpop.xlane.xlu0 %613
        %v615 = vsel %vm541, %v593, 0.0
        %616 = vadd.xlane.f32.xlu0 %v615
        %v617 = vpop.xlane.xlu0 %616
        %v618 = vsel %vm541, %v594, 0.0
        %619 = vadd.xlane.f32.xlu0 %v618
        %v620 = vpop.xlane.xlu0 %619
        %v621 = vsel %vm541, %v595, 0.0
        %622 = vadd.xlane.f32.xlu0 %v621
        %v623 = vpop.xlane.xlu0 %622
        %v624 = vsel %vm541, %v596, 0.0
        %625 = vadd.xlane.f32.xlu0 %v624
        %v626 = vpop.xlane.xlu0 %625
        %v627 = vsel %vm541, %v597, 0.0
        %628 = vadd.xlane.f32.xlu0 %v627
        %v629 = vpop.xlane.xlu0 %628
        %v630 = vsel %vm541, %v598, 0.0
        %631 = vadd.xlane.f32.xlu0 %v630
        %v632 = vpop.xlane.xlu0 %631
        %v633 = vsel %vm541, %v599, 0.0
        %634 = vadd.xlane.f32.xlu0 %v633
        %v635 = vpop.xlane.xlu0 %634
        %v636 = vsel %vm541, %v600, 0.0
        %637 = vadd.xlane.f32.xlu0 %v636
        %v638 = vpop.xlane.xlu0 %637
        %v639 = vsel %vm541, %v601, 0.0
        %640 = vadd.xlane.f32.xlu0 %v639
        %v641 = vpop.xlane.xlu0 %640
        %v642 = vsel %vm541, %v602, 0.0
        %643 = vadd.xlane.f32.xlu0 %v642
        %v644 = vpop.xlane.xlu0 %643
        %v645 = vsel %vm541, %v603, 0.0
        %646 = vadd.xlane.f32.xlu0 %v645
        %v647 = vpop.xlane.xlu0 %646
        %v648 = vsel %vm541, %v604, 0.0
        %649 = vadd.xlane.f32.xlu0 %v648
        %v650 = vpop.xlane.xlu0 %649
        %v651 = vsel %vm541, %v605, 0.0
        %652 = vadd.xlane.f32.xlu0 %v651
        %v653 = vpop.xlane.xlu0 %652
        %v654 = vsel %vm441, %v544, 0.0
        %v655 = vsel %vm442, %v547, 0.0
        %v656 = vsel %vm443, %v550, 0.0
        %v657 = vsel %vm444, %v553, 0.0
        %v658 = vsel %vm445, %v556, 0.0
        %v659 = vsel %vm446, %v559, 0.0
        %v660 = vsel %vm447, %v562, 0.0
        %v661 = vsel %vm448, %v565, 0.0
        %v662 = vsel %vm449, %v568, 0.0
        %v663 = vsel %vm450, %v571, 0.0
        %v664 = vsel %vm451, %v574, 0.0
        %v665 = vsel %vm452, %v577, 0.0
        %v666 = vsel %vm453, %v580, 0.0
        %v667 = vsel %vm454, %v583, 0.0
        %v668 = vsel %vm455, %v586, 0.0
        %v669 = vsel %vm456, %v589, 0.0
        %v670 = vsel %vm441, %v608, 0.0
        %v671 = vsel %vm442, %v611, 0.0
        %v672 = vsel %vm443, %v614, 0.0
        %v673 = vsel %vm444, %v617, 0.0
        %v674 = vsel %vm445, %v620, 0.0
        %v675 = vsel %vm446, %v623, 0.0
        %v676 = vsel %vm447, %v626, 0.0
        %v677 = vsel %vm448, %v629, 0.0
        %v678 = vsel %vm449, %v632, 0.0
        %v679 = vsel %vm450, %v635, 0.0
        %v680 = vsel %vm451, %v638, 0.0
        %v681 = vsel %vm452, %v641, 0.0
        %v682 = vsel %vm453, %v644, 0.0
        %v683 = vsel %vm454, %v647, 0.0
        %v684 = vsel %vm455, %v650, 0.0
        %v685 = vsel %vm456, %v653, 0.0
        %v686 = vld [vmem:[%s342] sm:$0x1]
        %v687 = vsel %vm460, %v686, 0.0
        %v688 = vld [vmem:[#allocation2] sm:$0x1]
        %v689 = vmin.f32 %v654, 0.0
        %v690 = vmin.f32 %v655, 0.0
        %v691 = vmin.f32 %v656, 0.0
        %v692 = vmin.f32 %v657, 0.0
        %v693 = vmin.f32 %v658, 0.0
        %v694 = vmin.f32 %v659, 0.0
        %v695 = vmin.f32 %v660, 0.0
        %v696 = vmin.f32 %v661, 0.0
        %v697 = vmin.f32 %v662, 0.0
        %v698 = vmin.f32 %v663, 0.0
        %v699 = vmin.f32 %v664, 0.0
        %v700 = vmin.f32 %v665, 0.0
        %v701 = vmin.f32 %v666, 0.0
        %v702 = vmin.f32 %v667, 0.0
        %v703 = vmin.f32 %v668, 0.0
        %v704 = vmin.f32 %v669, 0.0
        %v705 = vand.u32 2147483647, %v654
        %v706 = vand.u32 2147483647, %v655
        %v707 = vand.u32 2147483647, %v656
        %v708 = vand.u32 2147483647, %v657
        %v709 = vand.u32 2147483647, %v658
        %v710 = vand.u32 2147483647, %v659
        %v711 = vand.u32 2147483647, %v660
        %v712 = vand.u32 2147483647, %v661
        %v713 = vand.u32 2147483647, %v662
        %v714 = vand.u32 2147483647, %v663
        %v715 = vand.u32 2147483647, %v664
        %v716 = vand.u32 2147483647, %v665
        %v717 = vand.u32 2147483647, %v666
        %v718 = vand.u32 2147483647, %v667
        %v719 = vand.u32 2147483647, %v668
        %v720 = vand.u32 2147483647, %v669
        %v721 = vsub.f32 0.0, %v705
        %v722 = vsub.f32 0.0, %v706
        %v723 = vsub.f32 0.0, %v707
        %v724 = vsub.f32 0.0, %v708
        %v725 = vsub.f32 0.0, %v709
        %v726 = vsub.f32 0.0, %v710
        %v727 = vsub.f32 0.0, %v711
        %v728 = vsub.f32 0.0, %v712
        %v729 = vsub.f32 0.0, %v713
        %v730 = vsub.f32 0.0, %v714
        %v731 = vsub.f32 0.0, %v715
        %v732 = vsub.f32 0.0, %v716
        %v733 = vsub.f32 0.0, %v717
        %v734 = vsub.f32 0.0, %v718
        %v735 = vsub.f32 0.0, %v719
        %v736 = vsub.f32 0.0, %v720
        %v737 = vmul.f32 %v721, 1.442695
        %v738 = vpow.pop %v737
        %v739 = vmul.f32 %v722, 1.442695
        %v740 = vpow.pop %v739
        %v741 = vmul.f32 %v723, 1.442695
        %v742 = vpow.pop %v741
        %v743 = vmul.f32 %v724, 1.442695
        %v744 = vpow.pop %v743
        %v745 = vmul.f32 %v725, 1.442695
        %v746 = vpow.pop %v745
        %v747 = vmul.f32 %v726, 1.442695
        %v748 = vpow.pop %v747
        %v749 = vmul.f32 %v727, 1.442695
        %v750 = vpow.pop %v749
        %v751 = vmul.f32 %v728, 1.442695
        %v752 = vpow.pop %v751
        %v753 = vmul.f32 %v729, 1.442695
        %v754 = vpow.pop %v753
        %v755 = vmul.f32 %v730, 1.442695
        %v756 = vpow.pop %v755
        %v757 = vmul.f32 %v731, 1.442695
        %v758 = vpow.pop %v757
        %v759 = vmul.f32 %v732, 1.442695
        %v760 = vpow.pop %v759
        %v761 = vmul.f32 %v733, 1.442695
        %v762 = vpow.pop %v761
        %v763 = vmul.f32 %v734, 1.442695
        %v764 = vpow.pop %v763
        %v765 = vmul.f32 %v735, 1.442695
        %v766 = vpow.pop %v765
        %v767 = vmul.f32 %v736, 1.442695
        %v768 = vpow.pop %v767
        %v769 = vadd.f32 %v738, 1.0
        %v770 = vadd.f32 %v740, 1.0
        %v771 = vadd.f32 %v742, 1.0
        %v772 = vadd.f32 %v744, 1.0
        %v773 = vadd.f32 %v746, 1.0
        %v774 = vadd.f32 %v748, 1.0
        %v775 = vadd.f32 %v750, 1.0
        %v776 = vadd.f32 %v752, 1.0
        %v777 = vadd.f32 %v754, 1.0
        %v778 = vadd.f32 %v756, 1.0
        %v779 = vadd.f32 %v758, 1.0
        %v780 = vadd.f32 %v760, 1.0
        %v781 = vadd.f32 %v762, 1.0
        %v782 = vadd.f32 %v764, 1.0
        %v783 = vadd.f32 %v766, 1.0
        %v784 = vadd.f32 %v768, 1.0
        %v785 = vlog2.pop %v769
        %v786 = vmul.f32 %v785, 0.6931472
        %v787 = vlog2.pop %v770
        %v788 = vmul.f32 %v787, 0.6931472
        %v789 = vlog2.pop %v771
        %v790 = vmul.f32 %v789, 0.6931472
        %v791 = vlog2.pop %v772
        %v792 = vmul.f32 %v791, 0.6931472
        %v793 = vlog2.pop %v773
        %v794 = vmul.f32 %v793, 0.6931472
        %v795 = vlog2.pop %v774
        %v796 = vmul.f32 %v795, 0.6931472
        %v797 = vlog2.pop %v775
        %v798 = vmul.f32 %v797, 0.6931472
        %v799 = vlog2.pop %v776
        %v800 = vmul.f32 %v799, 0.6931472
        %v801 = vlog2.pop %v777
        %v802 = vmul.f32 %v801, 0.6931472
        %v803 = vlog2.pop %v778
        %v804 = vmul.f32 %v803, 0.6931472
        %v805 = vlog2.pop %v779
        %v806 = vmul.f32 %v805, 0.6931472
        %v807 = vlog2.pop %v780
        %v808 = vmul.f32 %v807, 0.6931472
        %v809 = vlog2.pop %v781
        %v810 = vmul.f32 %v809, 0.6931472
        %v811 = vlog2.pop %v782
        %v812 = vmul.f32 %v811, 0.6931472
        %v813 = vlog2.pop %v783
        %v814 = vmul.f32 %v813, 0.6931472
        %v815 = vlog2.pop %v784
        %v816 = vmul.f32 %v815, 0.6931472
        %v817 = vsub.f32 %v689, %v786
        %v818 = vsub.f32 %v690, %v788
        %v819 = vsub.f32 %v691, %v790
        %v820 = vsub.f32 %v692, %v792
        %v821 = vsub.f32 %v693, %v794
        %v822 = vsub.f32 %v694, %v796
        %v823 = vsub.f32 %v695, %v798
        %v824 = vsub.f32 %v696, %v800
        %v825 = vsub.f32 %v697, %v802
        %v826 = vsub.f32 %v698, %v804
        %v827 = vsub.f32 %v699, %v806
        %v828 = vsub.f32 %v700, %v808
        %v829 = vsub.f32 %v701, %v810
        %v830 = vsub.f32 %v702, %v812
        %v831 = vsub.f32 %v703, %v814
        %v832 = vsub.f32 %v704, %v816
        %833 = vmatprep.subr.mxu0 0.0
        %834 = vmatpush1.msra.mxu0 %v817
        %835 = vmatprep.subr.mxu0 0.0
        %836 = vmatpush1.msra.mxu0 %v818
        %837 = vmatprep.subr.mxu0 0.0
        %838 = vmatpush1.msra.mxu0 %v819
        %839 = vmatprep.subr.mxu0 0.0
        %840 = vmatpush1.msra.mxu0 %v820
        %841 = vmatprep.subr.mxu0 0.0
        %842 = vmatpush1.msra.mxu0 %v821
        %843 = vmatprep.subr.mxu0 0.0
        %844 = vmatpush1.msra.mxu0 %v822
        %845 = vmatprep.subr.mxu0 0.0
        %846 = vmatpush1.msra.mxu0 %v823
        %847 = vmatprep.subr.mxu0 0.0
        %848 = vmatpush1.msra.mxu0 %v824
        %849 = vmatprep.subr.mxu0 0.0
        %850 = vmatpush1.msra.mxu0 %v825
        %851 = vmatprep.subr.mxu0 0.0
        %852 = vmatpush1.msra.mxu0 %v826
        %853 = vmatprep.subr.mxu0 0.0
        %854 = vmatpush1.msra.mxu0 %v827
        %855 = vmatprep.subr.mxu0 0.0
        %856 = vmatpush1.msra.mxu0 %v828
        %857 = vmatprep.subr.mxu0 0.0
        %858 = vmatpush1.msra.mxu0 %v829
        %859 = vmatprep.subr.mxu0 0.0
        %860 = vmatpush1.msra.mxu0 %v830
        %861 = vmatprep.subr.mxu0 0.0
        %862 = vmatpush1.msra.mxu0 %v831
        %863 = vmatprep.subr.mxu0 0.0
        %864 = vmatpush1.msra.mxu0 %v832
        %865 = vmatprep.subr.mxu0 0.0
        %866 = vmatpush1.msra.mxu0 0.0
        %867 = vmatprep.subr.mxu0 0.0
        %868 = vmatpush1.msra.mxu0 0.0
        %869 = vmatprep.subr.mxu0 0.0
        %870 = vmatpush1.msra.mxu0 0.0
        %871 = vmatprep.subr.mxu0 0.0
        %872 = vmatpush1.msra.mxu0 0.0
        %873 = vmatprep.subr.mxu0 0.0
        %874 = vmatpush1.msra.mxu0 0.0
        %875 = vmatprep.subr.mxu0 0.0
        %876 = vmatpush1.msra.mxu0 0.0
        %877 = vmatprep.subr.mxu0 0.0
        %878 = vmatpush1.msra.mxu0 0.0
        %879 = vmatprep.subr.mxu0 0.0
        %880 = vmatpush1.msra.mxu0 0.0
        %881 = vmatprep.subr.mxu0 0.0
        %882 = vmatpush1.msra.mxu0 0.0
        %883 = vmatprep.subr.mxu0 0.0
        %884 = vmatpush1.msra.mxu0 0.0
        %885 = vmatprep.subr.mxu0 0.0
        %886 = vmatpush1.msra.mxu0 0.0
        %887 = vmatprep.subr.mxu0 0.0
        %888 = vmatpush1.msra.mxu0 0.0
        %889 = vmatprep.subr.mxu0 0.0
        %890 = vmatpush1.msra.mxu0 0.0
        %891 = vmatprep.subr.mxu0 0.0
        %892 = vmatpush1.msra.mxu0 0.0
        %893 = vmatprep.subr.mxu0 0.0
        %894 = vmatpush1.msra.mxu0 0.0
        %895 = vmatprep.subr.mxu0 0.0
        %896 = vmatpush1.msra.mxu0 0.0
        %897 = vmatprep.mubr.f32.mxu0 0.0
        %898 = vmatmul.mubr.f32.gmra.mrb[0].mxu0 %v687
        %v899 = vpop.f32.mrb[0].mxu0
        %v900 = vadd.f32 0.0, %v899
        %v901 = vpop.f32.mrb[0].mxu0
        %902 = vdwg.mxu0
        %v903 = vsub.f32 0.0, %v900
        %v904 = vadd.f32 %v688, %v903
        %vm905 = vcmask 0
        %906 = vst.msk [vmem:[#allocation2] sm:$0x1] %vm905, %v904
        %v907 = vld [vmem:[#allocation4] sm:$0x1]
        %v908 = vmin.f32 %v670, 0.0
        %v909 = vmin.f32 %v671, 0.0
        %v910 = vmin.f32 %v672, 0.0
        %v911 = vmin.f32 %v673, 0.0
        %v912 = vmin.f32 %v674, 0.0
        %v913 = vmin.f32 %v675, 0.0
        %v914 = vmin.f32 %v676, 0.0
        %v915 = vmin.f32 %v677, 0.0
        %v916 = vmin.f32 %v678, 0.0
        %v917 = vmin.f32 %v679, 0.0
        %v918 = vmin.f32 %v680, 0.0
        %v919 = vmin.f32 %v681, 0.0
        %v920 = vmin.f32 %v682, 0.0
        %v921 = vmin.f32 %v683, 0.0
        %v922 = vmin.f32 %v684, 0.0
        %v923 = vmin.f32 %v685, 0.0
        %v924 = vand.u32 2147483647, %v670
        %v925 = vand.u32 2147483647, %v671
        %v926 = vand.u32 2147483647, %v672
        %v927 = vand.u32 2147483647, %v673
        %v928 = vand.u32 2147483647, %v674
        %v929 = vand.u32 2147483647, %v675
        %v930 = vand.u32 2147483647, %v676
        %v931 = vand.u32 2147483647, %v677
        %v932 = vand.u32 2147483647, %v678
        %v933 = vand.u32 2147483647, %v679
        %v934 = vand.u32 2147483647, %v680
        %v935 = vand.u32 2147483647, %v681
        %v936 = vand.u32 2147483647, %v682
        %v937 = vand.u32 2147483647, %v683
        %v938 = vand.u32 2147483647, %v684
        %v939 = vand.u32 2147483647, %v685
        %v940 = vsub.f32 0.0, %v924
        %v941 = vsub.f32 0.0, %v925
        %v942 = vsub.f32 0.0, %v926
        %v943 = vsub.f32 0.0, %v927
        %v944 = vsub.f32 0.0, %v928
        %v945 = vsub.f32 0.0, %v929
        %v946 = vsub.f32 0.0, %v930
        %v947 = vsub.f32 0.0, %v931
        %v948 = vsub.f32 0.0, %v932
        %v949 = vsub.f32 0.0, %v933
        %v950 = vsub.f32 0.0, %v934
        %v951 = vsub.f32 0.0, %v935
        %v952 = vsub.f32 0.0, %v936
        %v953 = vsub.f32 0.0, %v937
        %v954 = vsub.f32 0.0, %v938
        %v955 = vsub.f32 0.0, %v939
        %v956 = vmul.f32 %v940, 1.442695
        %v957 = vpow.pop %v956
        %v958 = vmul.f32 %v941, 1.442695
        %v959 = vpow.pop %v958
        %v960 = vmul.f32 %v942, 1.442695
        %v961 = vpow.pop %v960
        %v962 = vmul.f32 %v943, 1.442695
        %v963 = vpow.pop %v962
        %v964 = vmul.f32 %v944, 1.442695
        %v965 = vpow.pop %v964
        %v966 = vmul.f32 %v945, 1.442695
        %v967 = vpow.pop %v966
        %v968 = vmul.f32 %v946, 1.442695
        %v969 = vpow.pop %v968
        %v970 = vmul.f32 %v947, 1.442695
        %v971 = vpow.pop %v970
        %v972 = vmul.f32 %v948, 1.442695
        %v973 = vpow.pop %v972
        %v974 = vmul.f32 %v949, 1.442695
        %v975 = vpow.pop %v974
        %v976 = vmul.f32 %v950, 1.442695
        %v977 = vpow.pop %v976
        %v978 = vmul.f32 %v951, 1.442695
        %v979 = vpow.pop %v978
        %v980 = vmul.f32 %v952, 1.442695
        %v981 = vpow.pop %v980
        %v982 = vmul.f32 %v953, 1.442695
        %v983 = vpow.pop %v982
        %v984 = vmul.f32 %v954, 1.442695
        %v985 = vpow.pop %v984
        %v986 = vmul.f32 %v955, 1.442695
        %v987 = vpow.pop %v986
        %v988 = vadd.f32 %v957, 1.0
        %v989 = vadd.f32 %v959, 1.0
        %v990 = vadd.f32 %v961, 1.0
        %v991 = vadd.f32 %v963, 1.0
        %v992 = vadd.f32 %v965, 1.0
        %v993 = vadd.f32 %v967, 1.0
        %v994 = vadd.f32 %v969, 1.0
        %v995 = vadd.f32 %v971, 1.0
        %v996 = vadd.f32 %v973, 1.0
        %v997 = vadd.f32 %v975, 1.0
        %v998 = vadd.f32 %v977, 1.0
        %v999 = vadd.f32 %v979, 1.0
        %v1000 = vadd.f32 %v981, 1.0
        %v1001 = vadd.f32 %v983, 1.0
        %v1002 = vadd.f32 %v985, 1.0
        %v1003 = vadd.f32 %v987, 1.0
        %v1004 = vlog2.pop %v988
        %v1005 = vmul.f32 %v1004, 0.6931472
        %v1006 = vlog2.pop %v989
        %v1007 = vmul.f32 %v1006, 0.6931472
        %v1008 = vlog2.pop %v990
        %v1009 = vmul.f32 %v1008, 0.6931472
        %v1010 = vlog2.pop %v991
        %v1011 = vmul.f32 %v1010, 0.6931472
        %v1012 = vlog2.pop %v992
        %v1013 = vmul.f32 %v1012, 0.6931472
        %v1014 = vlog2.pop %v993
        %v1015 = vmul.f32 %v1014, 0.6931472
        %v1016 = vlog2.pop %v994
        %v1017 = vmul.f32 %v1016, 0.6931472
        %v1018 = vlog2.pop %v995
        %v1019 = vmul.f32 %v1018, 0.6931472
        %v1020 = vlog2.pop %v996
        %v1021 = vmul.f32 %v1020, 0.6931472
        %v1022 = vlog2.pop %v997
        %v1023 = vmul.f32 %v1022, 0.6931472
        %v1024 = vlog2.pop %v998
        %v1025 = vmul.f32 %v1024, 0.6931472
        %v1026 = vlog2.pop %v999
        %v1027 = vmul.f32 %v1026, 0.6931472
        %v1028 = vlog2.pop %v1000
        %v1029 = vmul.f32 %v1028, 0.6931472
        %v1030 = vlog2.pop %v1001
        %v1031 = vmul.f32 %v1030, 0.6931472
        %v1032 = vlog2.pop %v1002
        %v1033 = vmul.f32 %v1032, 0.6931472
        %v1034 = vlog2.pop %v1003
        %v1035 = vmul.f32 %v1034, 0.6931472
        %v1036 = vsub.f32 %v908, %v1005
        %v1037 = vsub.f32 %v909, %v1007
        %v1038 = vsub.f32 %v910, %v1009
        %v1039 = vsub.f32 %v911, %v1011
        %v1040 = vsub.f32 %v912, %v1013
        %v1041 = vsub.f32 %v913, %v1015
        %v1042 = vsub.f32 %v914, %v1017
        %v1043 = vsub.f32 %v915, %v1019
        %v1044 = vsub.f32 %v916, %v1021
        %v1045 = vsub.f32 %v917, %v1023
        %v1046 = vsub.f32 %v918, %v1025
        %v1047 = vsub.f32 %v919, %v1027
        %v1048 = vsub.f32 %v920, %v1029
        %v1049 = vsub.f32 %v921, %v1031
        %v1050 = vsub.f32 %v922, %v1033
        %v1051 = vsub.f32 %v923, %v1035
        %v1052 = vsel %vm441, %v1036, 0.0
        %v1053 = vsel %vm442, %v1037, 0.0
        %v1054 = vsel %vm443, %v1038, 0.0
        %v1055 = vsel %vm444, %v1039, 0.0
        %v1056 = vsel %vm445, %v1040, 0.0
        %v1057 = vsel %vm446, %v1041, 0.0
        %v1058 = vsel %vm447, %v1042, 0.0
        %v1059 = vsel %vm448, %v1043, 0.0
        %v1060 = vsel %vm449, %v1044, 0.0
        %v1061 = vsel %vm450, %v1045, 0.0
        %v1062 = vsel %vm451, %v1046, 0.0
        %v1063 = vsel %vm452, %v1047, 0.0
        %v1064 = vsel %vm453, %v1048, 0.0
        %v1065 = vsel %vm454, %v1049, 0.0
        %v1066 = vsel %vm455, %v1050, 0.0
        %v1067 = vsel %vm456, %v1051, 0.0
        %vm1068 = vcmask 7168
        %v1069 = vsel %vm1068, %v1052, 0.0
        %v1070 = vsel %vm1068, %v1053, 0.0
        %v1071 = vadd.f32 %v1069, %v1070
        %v1072 = vsel %vm1068, %v1054, 0.0
        %v1073 = vadd.f32 %v1071, %v1072
        %v1074 = vsel %vm1068, %v1055, 0.0
        %v1075 = vadd.f32 %v1073, %v1074
        %v1076 = vsel %vm1068, %v1056, 0.0
        %v1077 = vadd.f32 %v1075, %v1076
        %v1078 = vsel %vm1068, %v1057, 0.0
        %v1079 = vadd.f32 %v1077, %v1078
        %v1080 = vsel %vm1068, %v1058, 0.0
        %v1081 = vadd.f32 %v1079, %v1080
        %v1082 = vsel %vm1068, %v1059, 0.0
        %v1083 = vadd.f32 %v1081, %v1082
        %v1084 = vsel %vm1068, %v1060, 0.0
        %v1085 = vadd.f32 %v1083, %v1084
        %v1086 = vsel %vm1068, %v1061, 0.0
        %v1087 = vadd.f32 %v1085, %v1086
        %v1088 = vsel %vm1068, %v1062, 0.0
        %v1089 = vadd.f32 %v1087, %v1088
        %v1090 = vsel %vm1068, %v1063, 0.0
        %v1091 = vadd.f32 %v1089, %v1090
        %v1092 = vsel %vm1068, %v1064, 0.0
        %v1093 = vadd.f32 %v1091, %v1092
        %v1094 = vsel %vm1068, %v1065, 0.0
        %v1095 = vadd.f32 %v1093, %v1094
        %v1096 = vsel %vm1068, %v1066, 0.0
        %v1097 = vadd.f32 %v1095, %v1096
        %v1098 = vsel %vm1068, %v1067, 0.0
        %v1099 = vadd.f32 %v1097, %v1098
        %1100 = vadd.xlane.f32.xlu0 %v1099
        %v1101 = vpop.xlane.xlu0 %1100
        %v1102 = vrot.slane %v1101, 4
        %v1103 = vadd.f32 %v1101, %v1102
        %v1104 = vrot.slane %v1103, 2
        %v1105 = vadd.f32 %v1103, %v1104
        %v1106 = vrot.slane %v1105, 1
        %v1107 = vadd.f32 %v1105, %v1106
        %s1108 = vtos %v1107
        %v1109 = vstv %s1108
        %v1110 = vsub.f32 0.0, %v1109
        %v1111 = vadd.f32 %v907, %v1110
        %1112 = vst.msk [vmem:[#allocation4] sm:$0x1] %vm905, %v1111
        // Predicated region
        $region45: #{tpu_custom_call.1} parent=39 // pred_check
          %p1113 = pneg %p163
        $region46: #{tpu_custom_call.1} parent=39 // pred_check_branch
          %1115 = sbr.rel (%p1113) target = $region48
        $region47: #{tpu_custom_call.1} parent=39 // pred_region
          %s1117 = ssub.s32 16, 16
          %1118 = vsyncadd [#allocation3], %s1117
          %s1120 = sshll.u32 [#allocation2], 4
          %s1121 = int_to_ptr.vmem [resolvable:$true] %s1120
          %1123 = dma.vmem_to_hbm [thread:$0]  %s1121, 16, %s5, [#allocation3]
        $region48: #{tpu_custom_call.1} parent=39 // pred_fallthru
          _
        // Predicated region
        $region49: #{tpu_custom_call.1} parent=39 // pred_check
          %p1124 = pneg %p184
        $region50: #{tpu_custom_call.1} parent=39 // pred_check_branch
          %1126 = sbr.rel (%p1124) target = $region52
        $region51: #{tpu_custom_call.1} parent=39 // pred_region
          %s1128 = ssub.s32 16, 16
          %1129 = vsyncadd [#allocation5], %s1128
          %s1131 = sshll.u32 [#allocation4], 4
          %s1132 = int_to_ptr.vmem [resolvable:$true] %s1131
          %1134 = dma.vmem_to_hbm [thread:$0]  %s1132, 16, %s6, [#allocation5]
        $region52: #{tpu_custom_call.1} parent=39 // pred_fallthru
          _
        // Predicated region
        $region53: #{tpu_custom_call.1} parent=39 // pred_check
          %p1135 = pneg %p163
        $region54: #{tpu_custom_call.1} parent=39 // pred_check_branch
          %1137 = sbr.rel (%p1135) target = $region56
        $region55: #{tpu_custom_call.1} parent=39 // pred_region
          %1138 = dma.done [#allocation3], 16
        $region56: #{tpu_custom_call.1} parent=39 // pred_fallthru
          _
        // Predicated region
        $region57: #{tpu_custom_call.1} parent=39 // pred_check
          %p1139 = pneg %p184
        $region58: #{tpu_custom_call.1} parent=39 // pred_check_branch
          %1141 = sbr.rel (%p1139) target = $region60
        $region59: #{tpu_custom_call.1} parent=39 // pred_region
          %1142 = dma.done [#allocation5], 16
        $region60: #{tpu_custom_call.1} parent=39 // pred_fallthru
          _
      $region40: #{tpu_custom_call.1} parent=5 // pred_fallthru
        _
      %p1143 = scmp.le.s32.totalorder 2, %s15
      // Predicated region
      $region61: #{tpu_custom_call.1} parent=5 // pred_check
        %p1144 = pneg %p1143
      $region62: #{tpu_custom_call.1} parent=5 // pred_check_branch
        %1146 = sbr.rel (%p1144) target = $region64
      $region63: #{tpu_custom_call.1} parent=5 // pred_region
        %s1147 = ssub.s32 %s15, 2
      $region64: #{tpu_custom_call.1} parent=5 // pred_fallthru
        _
    $region6: #{tpu_custom_call.1} parent=1 // loop_footer
      %s19 = sadd.s32 1, %s15
    $region7: #{tpu_custom_call.1} parent=1 // loop_footer_branch
      %14 = sbr.rel target = $region3
    $region8: #{tpu_custom_call.1} parent=1 // loop_exit
      _
    %1148 = vsyncpa [#allocation3], 1
    %s1149 = scalar_lea.sflag [#allocation3], 1
    %1150 = vsyncpa %s1149, 1
    %1151 = vsyncpa [#allocation5], 1

</llo_original>
